<compile_context>
chip_gen: v7x
topology: tpu7x:2x2x1
jax: 0.10.0
libtpu: 0.0.40
codegen_flags: <defaults>
</compile_context>

<pallas_src>
import functools

import jax
import jax.numpy as jnp
from jax import lax
from jax.experimental import pallas as pl
from jax.experimental.pallas import tpu as pltpu

_BN_EPS = 1e-5  # PyTorch BatchNorm1d default


def _swish(x):
    # Explicit exp + divide: stays on EUP/VPU, lowers cleanly everywhere.
    return x * (1.0 / (1.0 + jnp.exp(-x)))


# ----------------------------------------------------------------------------
# Kernel
# ----------------------------------------------------------------------------
def _conv_block_kernel(x_ref, w12_ref, w3_ref, o_ref, *, seg_len):
    # x_ref  : (1, Cp, T) f32, T = n_seg * seg_len (segments laid side by side
    #          along the lane axis; n_seg == 1 in the per-batch-grid config)
    # w12_ref: (C_out, 7*Cp + 3)  fused conv1∘conv2(+BN2) im2col weights
    #          [off-2 | off-1 | off0 | off+1 | off+2 | -CL | -CR | bias | -cbl | -cbr]
    # w3_ref : (1, 3*C_out + 1)   conv3(+BN3) im2col weights [prev|cen|next|bias]
    # o_ref  : (1, 1, T)
    x = x_ref[0].astype(jnp.float32)                    # (Cp, T)
    T = x.shape[-1]
    L = seg_len
    lane_ax = x.ndim - 1                                # positive axis index

    # Hoisted boundary masks (built once, reused by both convs).
    pos = lax.broadcasted_iota(jnp.int32, (1, T), 1) % L
    f32 = jnp.float32
    m_ge1 = (pos >= 1).astype(f32)          # valid "i-1" tap
    m_ge2 = (pos >= 2).astype(f32)          # valid "i-2" tap
    m_le1 = (pos <= L - 2).astype(f32)      # valid "i+1" tap
    m_le2 = (pos <= L - 3).astype(f32)      # valid "i+2" tap
    m_first = (pos == 0).astype(f32)        # segment column 0
    m_last = (pos == L - 1).astype(f32)     # segment column L-1
    ones = jnp.ones((1, T), f32)

    def shifted(h, s):
        # h[:, i - s] with wrap; wrap/segment leakage is zeroed by the masks.
        return jnp.roll(h, s, axis=lane_ax)

    # --- fused conv1 ∘ conv2 (+ folded BN2): single im2col dot --------------
    rhs12 = jnp.concatenate(
        [
            shifted(x, 2) * m_ge2,     # x_{i-2}
            shifted(x, 1) * m_ge1,     # x_{i-1}
            x,                         # x_i
            shifted(x, -1) * m_le1,    # x_{i+1}
            shifted(x, -2) * m_le2,    # x_{i+2}
            x * m_first,               # left-edge zero-padding fix-up
            x * m_last,                # right-edge zero-padding fix-up
            ones,                      # fused bias
            m_first,                   # left-edge bias fix-up
            m_last,                    # right-edge bias fix-up
        ],
        axis=0,
    )
    h = jnp.dot(w12_ref[...], rhs12, preferred_element_type=jnp.float32)
    h = _swish(h)                                        # (C_out, T)

    # --- conv3 (+ folded BN3) + swish ---------------------------------------
    rhs3 = jnp.concatenate(
        [
            shifted(h, 1) * m_ge1,     # h_{i-1}
            h,                         # h_i
            shifted(h, -1) * m_le1,    # h_{i+1}
            ones,                      # bias
        ],
        axis=0,
    )
    y = jnp.dot(w3_ref[...], rhs3, preferred_element_type=jnp.float32)
    y = _swish(y)                                        # (1, T)
    o_ref[0] = y.astype(o_ref.dtype)


# ----------------------------------------------------------------------------
# Weight packing (done once, at init)
# ----------------------------------------------------------------------------
def _fold_bn(w, b, bn):
    """Fold inference-mode BatchNorm1d into the preceding Conv1d."""
    gamma, beta, mean, var = bn
    s = gamma / jnp.sqrt(var + _BN_EPS)                  # (C,)
    return w * s[:, None, None], s * (b - mean) + beta


def _pack_weights(params, cp):
    """Build the fused conv1∘conv2(+BN2) and conv3(+BN3) im2col matrices."""
    w1, b1, w2, b2, bn2, w3, b3, bn3 = params
    c_out, c_in, _ = w1.shape

    w2f, b2f = _fold_bn(w2, b2, bn2)                     # (C_out, C_out, 3)
    w3f, b3f = _fold_bn(w3, b3, bn3)                     # (1, C_out, 3)

    # Pad conv1 in-channels to cp (zero weight columns match zero x rows).
    w1p = jnp.pad(w1, ((0, 0), (0, cp - c_in), (0, 0)))  # (C_out, cp, 3)

    # Composite k=5 taps: Wf[u] = sum_{s+t=u} w2f[:,:,s] @ w1p[:,:,t].
    wf = [
        sum(w2f[:, :, s] @ w1p[:, :, t]
            for s in range(3) for t in range(3) if s + t == u)
        for u in range(5)
    ]
    bf = (w2f[:, :, 0] + w2f[:, :, 1] + w2f[:, :, 2]) @ b1 + b2f

    # Exact edge fix-ups: conv2 zero-pads h1, not the "virtual" h1[-1]/h1[L].
    cl = w2f[:, :, 0] @ w1p[:, :, 2]          # subtract @ column 0
    cr = w2f[:, :, 2] @ w1p[:, :, 0]          # subtract @ column L-1
    cbl = w2f[:, :, 0] @ b1
    cbr = w2f[:, :, 2] @ b1

    w12 = jnp.concatenate(
        wf + [-cl, -cr, bf[:, None], -cbl[:, None], -cbr[:, None]],
        axis=1,
    ).astype(jnp.float32)                                 # (C_out, 7*cp + 3)

    w3m = jnp.concatenate(
        [w3f[:, :, 0], w3f[:, :, 1], w3f[:, :, 2], b3f[:, None]],
        axis=1,
    ).astype(jnp.float32)                                 # (1, 3*C_out + 1)
    return w12, w3m


# ----------------------------------------------------------------------------
# Wrapper
# ----------------------------------------------------------------------------
def _round_up(n, m):
    return ((n + m - 1) // m) * m


def _single_tensorcore_chip():
    """True for 1-TC chips (v5e/v6e); v7x has 2 TCs and keeps the batch grid."""
    try:
        kind = jax.devices()[0].device_kind.lower()
    except Exception:
        return True
    return not ("v7" in kind or "7x" in kind)


def make_conv_block(params, *, fold_batch=None):
    """Pack weights once and return a jitted forward: (N, C_in, L) -> (N, 1, L)."""
    c_in = params[0].shape[1]
    cp = _round_up(c_in, 8)
    w12, w3m = _pack_weights(params, cp)

    if fold_batch is None:
        fold_batch = _single_tensorcore_chip()

    def apply(x):
        n, c, l = x.shape
        xp = jnp.pad(x, ((0, 0), (0, cp - c), (0, 0)))    # (n, cp, l)

        if fold_batch:
            # Collapse the batch into the lane axis: one grid step, one wide
            # store; masks inside the kernel use lane % l.
            xk = jnp.transpose(xp, (1, 0, 2)).reshape(1, cp, n * l)
            n_prog, t = 1, n * l
            sem = ("arbitrary",)
        else:
            xk = xp
            n_prog, t = n, l
            sem = ("parallel",)

        kernel = functools.partial(_conv_block_kernel, seg_len=l)
        out = pl.pallas_call(
            kernel,
            out_shape=jax.ShapeDtypeStruct((n_prog, 1, t), x.dtype),
            grid=(n_prog,),
            in_specs=[
                pl.BlockSpec((1, cp, t), lambda b: (b, 0, 0)),
                pl.BlockSpec(w12.shape, lambda b: (0, 0)),
                pl.BlockSpec(w3m.shape, lambda b: (0, 0)),
            ],
            out_specs=pl.BlockSpec((1, 1, t), lambda b: (b, 0, 0)),
            compiler_params=pltpu.CompilerParams(dimension_semantics=sem),
        )(xk, w12, w3m)

        if fold_batch:
            return out[0, 0].reshape(n, l)[:, None, :]
        return out

    return jax.jit(apply)


# ----------------------------------------------------------------------------
# Pure-JAX reference (lax conv + explicit eval-mode BN) for checking
# ----------------------------------------------------------------------------
def _ref_forward(x, params):
    w1, b1, w2, b2, bn2, w3, b3, bn3 = params

    def conv1d(inp, w, b):
        y = lax.conv_general_dilated(
            inp, w, window_strides=(1,), padding=[(1, 1)],
            dimension_numbers=("NCH", "OIH", "NCH"))
        return y + b[None, :, None]

    def bn(inp, stats):
        gamma, beta, mean, var = stats
        s = gamma / jnp.sqrt(var + _BN_EPS)
        return (inp - mean[None, :, None]) * s[None, :, None] \
            + beta[None, :, None]

    h = conv1d(x, w1, b1)
    h = conv1d(h, w2, b2)
    h = bn(h, bn2)
    h = h * jax.nn.sigmoid(h)
    h = conv1d(h, w3, b3)
    h = bn(h, bn3)
    h = h * jax.nn.sigmoid(h)
    return h


if __name__ == "__main__":
    N, C_IN, C_OUT, L = 2, 4, 8, 128

    key = jax.random.PRNGKey(0)
    ks = jax.random.split(key, 15)
    x = jax.random.normal(ks[0], (N, C_IN, L), dtype=jnp.float32)

    # PyTorch Conv1d weight shapes: (out, in, k).
    w1 = 0.3 * jax.random.normal(ks[1], (C_OUT, C_IN, 3), dtype=jnp.float32)
    b1 = 0.1 * jax.random.normal(ks[2], (C_OUT,), dtype=jnp.float32)
    w2 = 0.3 * jax.random.normal(ks[3], (C_OUT, C_OUT, 3), dtype=jnp.float32)
    b2 = 0.1 * jax.random.normal(ks[4], (C_OUT,), dtype=jnp.float32)
    w3 = 0.3 * jax.random.normal(ks[5], (1, C_OUT, 3), dtype=jnp.float32)
    b3 = 0.1 * jax.random.normal(ks[6], (1,), dtype=jnp.float32)

    # BatchNorm parameters: (gamma, beta, running_mean, running_var).
    bn2 = (1.0 + 0.1 * jax.random.normal(ks[7], (C_OUT,), dtype=jnp.float32),
           0.1 * jax.random.normal(ks[8], (C_OUT,), dtype=jnp.float32),
           0.1 * jax.random.normal(ks[9], (C_OUT,), dtype=jnp.float32),
           0.5 + jnp.abs(jax.random.normal(ks[10], (C_OUT,),
                                           dtype=jnp.float32)))
    bn3 = (1.0 + 0.1 * jax.random.normal(ks[11], (1,), dtype=jnp.float32),
           0.1 * jax.random.normal(ks[12], (1,), dtype=jnp.float32),
           0.1 * jax.random.normal(ks[13], (1,), dtype=jnp.float32),
           0.5 + jnp.abs(jax.random.normal(ks[14], (1,), dtype=jnp.float32)))

    params = (w1, b1, w2, b2, bn2, w3, b3, bn3)
    ref = jax.block_until_ready(_ref_forward(x, params))

    # Device-appropriate default configuration.
    fwd = make_conv_block(params)
    out = jax.block_until_ready(fwd(x))
    assert out.shape == (N, 1, L), out.shape
    assert jnp.allclose(out, ref, rtol=1e-5, atol=1e-5), \
        float(jnp.max(jnp.abs(out - ref)))

    # Exercise both grid strategies explicitly (batch folded into lanes vs.
    # parallel per-batch grid) regardless of which chip we detected.
    for fb in (True, False):
        o = jax.block_until_ready(make_conv_block(params, fold_batch=fb)(x))
        assert o.shape == (N, 1, L), (fb, o.shape)
        assert jnp.allclose(o, ref, rtol=1e-5, atol=1e-5), \
            (fb, float(jnp.max(jnp.abs(o - ref))))

    print("KERNEL_OK")
</pallas_src>

<mosaic_0001>
module attributes {stable_mosaic.version = 11 : i64} {
  func.func @_conv_block_kernel(%arg0: i32, %arg1: memref<1x8x256xf32, #tpu.memory_space<vmem>>, %arg2: memref<8x59xf32, #tpu.memory_space<vmem>>, %arg3: memref<1x25xf32, #tpu.memory_space<vmem>>, %arg4: memref<1x1x256xf32, #tpu.memory_space<vmem>>) attributes {dimension_semantics = [#tpu.dimension_semantics<arbitrary>], iteration_bounds = array<i64: 1>, scalar_prefetch = 0 : i64, scratch_operands = 0 : i64, tpu.core_type = #tpu.core_type<tc>, window_params = [{transform_indices = @transform_0, window_bounds = array<i64: 1, 8, 256>}, {pipeline_mode = #tpu.pipeline_mode<synchronous>, transform_indices = @transform_1, window_bounds = array<i64: 8, 59>}, {pipeline_mode = #tpu.pipeline_mode<synchronous>, transform_indices = @transform_2, window_bounds = array<i64: 1, 25>}, {transform_indices = @transform_3, window_bounds = array<i64: 1, 1, 256>}]} {
    %c0 = arith.constant 0 : index
    %c0_0 = arith.constant 0 : index
    %c0_1 = arith.constant 0 : index
    %0 = vector.load %arg1[%c0, %c0_0, %c0_1] : memref<1x8x256xf32, #tpu.memory_space<vmem>>, vector<1x8x256xf32>
    %1 = vector.shape_cast %0 : vector<1x8x256xf32> to vector<8x256xf32>
    %2 = tpu.iota {dimensions = array<i32: 1>} : vector<1x256xi32>
    %c128_i32 = arith.constant 128 : i32
    %c0_i32 = arith.constant 0 : i32
    %3 = arith.cmpi eq, %c128_i32, %c0_i32 : i32
    %c1_i32 = arith.constant 1 : i32
    %4 = arith.select %3, %c1_i32, %c128_i32 : i32
    %5 = vector.broadcast %4 : i32 to vector<1x256xi32>
    %6 = arith.remsi %2, %5 : vector<1x256xi32>
    %c0_i32_2 = arith.constant 0 : i32
    %7 = vector.broadcast %c0_i32_2 : i32 to vector<1x256xi32>
    %8 = arith.cmpi ne, %6, %7 : vector<1x256xi32>
    %c0_i32_3 = arith.constant 0 : i32
    %9 = vector.broadcast %c0_i32_3 : i32 to vector<1x256xi32>
    %10 = arith.cmpi slt, %6, %9 : vector<1x256xi32>
    %c0_i32_4 = arith.constant 0 : i32
    %11 = arith.cmpi slt, %4, %c0_i32_4 : i32
    %12 = vector.broadcast %11 : i1 to vector<1x256xi1>
    %13 = vector.broadcast %12 : vector<1x256xi1> to vector<1x256xi1>
    %14 = arith.xori %10, %13 : vector<1x256xi1>
    %15 = arith.andi %14, %8 : vector<1x256xi1>
    %16 = vector.broadcast %4 : i32 to vector<1x256xi32>
    %17 = arith.addi %6, %16 : vector<1x256xi32>
    %18 = arith.select %15, %17, %6 : vector<1x256xi1>, vector<1x256xi32>
    %c1_i32_5 = arith.constant 1 : i32
    %19 = vector.broadcast %c1_i32_5 : i32 to vector<1x256xi32>
    %20 = arith.cmpi sge, %18, %19 : vector<1x256xi32>
    %21 = arith.extui %20 : vector<1x256xi1> to vector<1x256xi32>
    %22 = arith.sitofp %21 : vector<1x256xi32> to vector<1x256xf32>
    %c2_i32 = arith.constant 2 : i32
    %23 = vector.broadcast %c2_i32 : i32 to vector<1x256xi32>
    %24 = arith.cmpi sge, %18, %23 : vector<1x256xi32>
    %25 = arith.extui %24 : vector<1x256xi1> to vector<1x256xi32>
    %26 = arith.sitofp %25 : vector<1x256xi32> to vector<1x256xf32>
    %c126_i32 = arith.constant 126 : i32
    %27 = vector.broadcast %c126_i32 : i32 to vector<1x256xi32>
    %28 = arith.cmpi sle, %18, %27 : vector<1x256xi32>
    %29 = arith.extui %28 : vector<1x256xi1> to vector<1x256xi32>
    %30 = arith.sitofp %29 : vector<1x256xi32> to vector<1x256xf32>
    %c125_i32 = arith.constant 125 : i32
    %31 = vector.broadcast %c125_i32 : i32 to vector<1x256xi32>
    %32 = arith.cmpi sle, %18, %31 : vector<1x256xi32>
    %33 = arith.extui %32 : vector<1x256xi1> to vector<1x256xi32>
    %34 = arith.sitofp %33 : vector<1x256xi32> to vector<1x256xf32>
    %c0_i32_6 = arith.constant 0 : i32
    %35 = vector.broadcast %c0_i32_6 : i32 to vector<1x256xi32>
    %36 = arith.cmpi eq, %18, %35 : vector<1x256xi32>
    %37 = arith.extui %36 : vector<1x256xi1> to vector<1x256xi32>
    %38 = arith.sitofp %37 : vector<1x256xi32> to vector<1x256xf32>
    %c127_i32 = arith.constant 127 : i32
    %39 = vector.broadcast %c127_i32 : i32 to vector<1x256xi32>
    %40 = arith.cmpi eq, %18, %39 : vector<1x256xi32>
    %41 = arith.extui %40 : vector<1x256xi1> to vector<1x256xi32>
    %42 = arith.sitofp %41 : vector<1x256xi32> to vector<1x256xf32>
    %cst = arith.constant 1.000000e+00 : f32
    %43 = vector.broadcast %cst : f32 to vector<1x256xf32>
    %44 = vector.extract_strided_slice %1 {offsets = [0, 254], sizes = [8, 2], strides = [1, 1]} : vector<8x256xf32> to vector<8x2xf32>
    %45 = vector.extract_strided_slice %1 {offsets = [0, 0], sizes = [8, 254], strides = [1, 1]} : vector<8x256xf32> to vector<8x254xf32>
    %46 = tpu.concatenate %44, %45 in 1 : vector<8x2xf32>, vector<8x254xf32> -> vector<8x256xf32>
    %47 = vector.broadcast %26 : vector<1x256xf32> to vector<8x256xf32>
    %48 = arith.mulf %46, %47 : vector<8x256xf32>
    %49 = vector.extract_strided_slice %1 {offsets = [0, 255], sizes = [8, 1], strides = [1, 1]} : vector<8x256xf32> to vector<8x1xf32>
    %50 = vector.extract_strided_slice %1 {offsets = [0, 0], sizes = [8, 255], strides = [1, 1]} : vector<8x256xf32> to vector<8x255xf32>
    %51 = tpu.concatenate %49, %50 in 1 : vector<8x1xf32>, vector<8x255xf32> -> vector<8x256xf32>
    %52 = vector.broadcast %22 : vector<1x256xf32> to vector<8x256xf32>
    %53 = arith.mulf %51, %52 : vector<8x256xf32>
    %54 = vector.extract_strided_slice %1 {offsets = [0, 1], sizes = [8, 255], strides = [1, 1]} : vector<8x256xf32> to vector<8x255xf32>
    %55 = vector.extract_strided_slice %1 {offsets = [0, 0], sizes = [8, 1], strides = [1, 1]} : vector<8x256xf32> to vector<8x1xf32>
    %56 = tpu.concatenate %54, %55 in 1 : vector<8x255xf32>, vector<8x1xf32> -> vector<8x256xf32>
    %57 = vector.broadcast %30 : vector<1x256xf32> to vector<8x256xf32>
    %58 = arith.mulf %56, %57 : vector<8x256xf32>
    %59 = vector.extract_strided_slice %1 {offsets = [0, 2], sizes = [8, 254], strides = [1, 1]} : vector<8x256xf32> to vector<8x254xf32>
    %60 = vector.extract_strided_slice %1 {offsets = [0, 0], sizes = [8, 2], strides = [1, 1]} : vector<8x256xf32> to vector<8x2xf32>
    %61 = tpu.concatenate %59, %60 in 1 : vector<8x254xf32>, vector<8x2xf32> -> vector<8x256xf32>
    %62 = vector.broadcast %34 : vector<1x256xf32> to vector<8x256xf32>
    %63 = arith.mulf %61, %62 : vector<8x256xf32>
    %64 = vector.broadcast %38 : vector<1x256xf32> to vector<8x256xf32>
    %65 = arith.mulf %1, %64 : vector<8x256xf32>
    %66 = vector.broadcast %42 : vector<1x256xf32> to vector<8x256xf32>
    %67 = arith.mulf %1, %66 : vector<8x256xf32>
    %68 = tpu.concatenate %48, %53, %1, %58, %63, %65, %67, %43, %38, %42 in 0 : vector<8x256xf32>, vector<8x256xf32>, vector<8x256xf32>, vector<8x256xf32>, vector<8x256xf32>, vector<8x256xf32>, vector<8x256xf32>, vector<1x256xf32>, vector<1x256xf32>, vector<1x256xf32> -> vector<59x256xf32>
    %c0_7 = arith.constant 0 : index
    %c0_8 = arith.constant 0 : index
    %69 = vector.load %arg2[%c0_7, %c0_8] : memref<8x59xf32, #tpu.memory_space<vmem>>, vector<8x59xf32>
    %cst_9 = arith.constant dense<0.000000e+00> : vector<8x256xf32>
    %70 = tpu.matmul %69, %68, %cst_9 {dimension_numbers = #tpu.dot_dimension_numbers<[1], [0], [0], [1], [0, 0, 1, 1], [], []>} : vector<8x59xf32>, vector<59x256xf32>, vector<8x256xf32> -> vector<8x256xf32>
    %cst_10 = arith.constant 0.000000e+00 : f32
    %71 = vector.broadcast %cst_10 : f32 to vector<8x256xf32>
    %72 = arith.subf %71, %70 : vector<8x256xf32>
    %73 = math.exp %72 : vector<8x256xf32>
    %cst_11 = arith.constant 1.000000e+00 : f32
    %74 = vector.broadcast %cst_11 : f32 to vector<8x256xf32>
    %75 = arith.addf %74, %73 : vector<8x256xf32>
    %cst_12 = arith.constant 1.000000e+00 : f32
    %76 = vector.broadcast %cst_12 : f32 to vector<8x256xf32>
    %77 = arith.divf %76, %75 : vector<8x256xf32>
    %78 = arith.mulf %70, %77 : vector<8x256xf32>
    %79 = vector.extract_strided_slice %78 {offsets = [0, 255], sizes = [8, 1], strides = [1, 1]} : vector<8x256xf32> to vector<8x1xf32>
    %80 = vector.extract_strided_slice %78 {offsets = [0, 0], sizes = [8, 255], strides = [1, 1]} : vector<8x256xf32> to vector<8x255xf32>
    %81 = tpu.concatenate %79, %80 in 1 : vector<8x1xf32>, vector<8x255xf32> -> vector<8x256xf32>
    %82 = vector.broadcast %22 : vector<1x256xf32> to vector<8x256xf32>
    %83 = arith.mulf %81, %82 : vector<8x256xf32>
    %84 = vector.extract_strided_slice %78 {offsets = [0, 1], sizes = [8, 255], strides = [1, 1]} : vector<8x256xf32> to vector<8x255xf32>
    %85 = vector.extract_strided_slice %78 {offsets = [0, 0], sizes = [8, 1], strides = [1, 1]} : vector<8x256xf32> to vector<8x1xf32>
    %86 = tpu.concatenate %84, %85 in 1 : vector<8x255xf32>, vector<8x1xf32> -> vector<8x256xf32>
    %87 = vector.broadcast %30 : vector<1x256xf32> to vector<8x256xf32>
    %88 = arith.mulf %86, %87 : vector<8x256xf32>
    %89 = tpu.concatenate %83, %78, %88, %43 in 0 : vector<8x256xf32>, vector<8x256xf32>, vector<8x256xf32>, vector<1x256xf32> -> vector<25x256xf32>
    %c0_13 = arith.constant 0 : index
    %c0_14 = arith.constant 0 : index
    %90 = vector.load %arg3[%c0_13, %c0_14] : memref<1x25xf32, #tpu.memory_space<vmem>>, vector<1x25xf32>
    %cst_15 = arith.constant dense<0.000000e+00> : vector<1x256xf32>
    %91 = tpu.matmul %90, %89, %cst_15 {dimension_numbers = #tpu.dot_dimension_numbers<[1], [0], [0], [1], [0, 0, 1, 1], [], []>} : vector<1x25xf32>, vector<25x256xf32>, vector<1x256xf32> -> vector<1x256xf32>
    %cst_16 = arith.constant 0.000000e+00 : f32
    %92 = vector.broadcast %cst_16 : f32 to vector<1x256xf32>
    %93 = arith.subf %92, %91 : vector<1x256xf32>
    %94 = math.exp %93 : vector<1x256xf32>
    %cst_17 = arith.constant 1.000000e+00 : f32
    %95 = vector.broadcast %cst_17 : f32 to vector<1x256xf32>
    %96 = arith.addf %95, %94 : vector<1x256xf32>
    %cst_18 = arith.constant 1.000000e+00 : f32
    %97 = vector.broadcast %cst_18 : f32 to vector<1x256xf32>
    %98 = arith.divf %97, %96 : vector<1x256xf32>
    %99 = arith.mulf %91, %98 : vector<1x256xf32>
    %c0_19 = arith.constant 0 : index
    %c0_20 = arith.constant 0 : index
    %c0_21 = arith.constant 0 : index
    %100 = vector.load %arg4[%c0_19, %c0_20, %c0_21] : memref<1x1x256xf32, #tpu.memory_space<vmem>>, vector<1x1x256xf32>
    %101 = vector.shape_cast %100 : vector<1x1x256xf32> to vector<1x256xf32>
    %102 = vector.shape_cast %99 : vector<1x256xf32> to vector<1x1x256xf32>
    tpu.vector_store %arg4[%c0_19, %c0_20, %c0_21], %102 {strides = array<i32>} : memref<1x1x256xf32, #tpu.memory_space<vmem>>, vector<1x1x256xf32>,
    return
  }
  func.func @transform_0(%arg0: i32) -> (i32, i32, i32) {
    %c0_i32 = arith.constant 0 : i32
    %c0_i32_0 = arith.constant 0 : i32
    %c0_i32_1 = arith.constant 0 : i32
    return %arg0, %c0_i32, %c0_i32_0 : i32, i32, i32
  }
  func.func @transform_1(%arg0: i32) -> (i32, i32) {
    %c0_i32 = arith.constant 0 : i32
    %c0_i32_0 = arith.constant 0 : i32
    %c0_i32_1 = arith.constant 0 : i32
    return %c0_i32, %c0_i32_0 : i32, i32
  }
  func.func @transform_2(%arg0: i32) -> (i32, i32) {
    %c0_i32 = arith.constant 0 : i32
    %c0_i32_0 = arith.constant 0 : i32
    %c0_i32_1 = arith.constant 0 : i32
    return %c0_i32, %c0_i32_0 : i32, i32
  }
  func.func @transform_3(%arg0: i32) -> (i32, i32, i32) {
    %c0_i32 = arith.constant 0 : i32
    %c0_i32_0 = arith.constant 0 : i32
    %c0_i32_1 = arith.constant 0 : i32
    return %arg0, %c0_i32, %c0_i32_0 : i32, i32, i32
  }
}

</mosaic_0001>

<llo_original>
// kernel: apply.1
$region0: #{apply.1}
  #allocation0 [shape = 'u32[]', space=smem, size = 0x4, offset = 0x4, fixed_abs, tag = 'smem constant byte address 0x4 - core index']
  #allocation1 [shape = 'u32[144,128]{1,0:T(1,128)}', space=vmem, size = 0x12000, scoped, tag = 'internal scratch']
  %s0 = inlined_call_operand.vmem [shape: f32[1,8,256], index: 0, kind: input, shape index: {}]
  %s1 = inlined_call_operand.vmem [shape: f32[8,59], index: 1, kind: input, shape index: {}]
  %s2 = inlined_call_operand.vmem [shape: f32[1,25], index: 2, kind: input, shape index: {}]
  %s3 = inlined_call_operand.hbm [shape: f32[1,1,256], index: 3, kind: output, shape index: {}]
  %s4 = sld [smem:[#allocation0]]
  $region22: #{apply.1} parent=0
    _
  %s6 = ssub.s32 1, %s4
  %s7 = scalar_select 0, %s6, %s4
  $region1: #{apply.1} parent=0
    #allocation2 [shape = 'u8[1024]{0}', space=vmem, size = 0x400, scoped, tag = 'output window, operand 0, single buffered']
    #allocation3 [shape = 's32[1]{0}', space=sflag, size = 0x4, scoped, tag = 'scoped memory for apply.1']
    %8 = vsyncpa [#allocation3], 0
    // Predicated region
    $region2: #{apply.1} parent=1 // pred_check
      _
    $region3: #{apply.1} parent=1 // pred_check_branch
      %10 = sbr.rel (0) target = $region5
    $region4: #{apply.1} parent=1 // pred_region
      _
    $region5: #{apply.1} parent=1 // pred_fallthru
      _
    // Predicated region
    $region6: #{apply.1} parent=1 // pred_check
      _
    $region7: #{apply.1} parent=1 // pred_check_branch
      %12 = sbr.rel (0) target = $region9
    $region8: #{apply.1} parent=1 // pred_region
      _
    $region9: #{apply.1} parent=1 // pred_fallthru
      _
    // Predicated region
    $region10: #{apply.1} parent=1 // pred_check
      _
    $region11: #{apply.1} parent=1 // pred_check_branch
      %14 = sbr.rel (0) target = $region13
    $region12: #{apply.1} parent=1 // pred_region
      _
    $region13: #{apply.1} parent=1 // pred_fallthru
      _
    %v15 = vld [vmem:[%s0] sm:$0xff]
    %v16 = vld [vmem:[%s0 + $0x8] sm:$0xff]
    %v17 = vlaneseq
    %v18 = vand.u32 %v17, 127
    %v19 = vadd.s32 %v18, 128
    %vm20 = vcmp.lt.s32.totalorder %v18, 0
    %v21 = vsub.s32 0, %v18
    %v22 = vsel %vm20, %v21, %v18
    %v23 = vshrl.u32 %v22, 7
    %v24 = vand.u32 %v22, 127
    %v25 = vsub.s32 0, %v24
    %v26 = vsel %vm20, %v25, %v24
    %vm27 = vcmp.lt.s32.totalorder %v19, 0
    %v28 = vsub.s32 0, %v19
    %v29 = vsel %vm27, %v28, %v19
    %v30 = vshrl.u32 %v29, 7
    %v31 = vand.u32 %v29, 127
    %v32 = vsub.s32 0, %v31
    %v33 = vsel %vm27, %v32, %v31
    %vm34 = vcmp.ne.s32.totalorder %v26, 0
    %vm35 = vcmp.ne.s32.totalorder %v33, 0
    %vm36 = vcmp.lt.s32.totalorder %v26, 0
    %vm37 = vcmp.lt.s32.totalorder %v33, 0
    %vm38 = vmand %vm36, %vm34
    %vm39 = vmand %vm37, %vm35
    %v40 = vadd.s32 %v26, 128
    %v41 = vadd.s32 %v33, 128
    %v42 = vsel %vm38, %v40, %v26
    %v43 = vsel %vm39, %v41, %v33
    %vm44 = vcmp.ge.s32.totalorder %v42, 1
    %vm45 = vcmp.ge.s32.totalorder %v43, 1
    %v46 = vsel %vm44, 1, 0
    %v47 = vsel %vm45, 1, 0
    %v48 = vcvt.s32.f32 %v46
    %v49 = vcvt.s32.f32 %v47
    %vm50 = vcmp.ge.s32.totalorder %v42, 2
    %vm51 = vcmp.ge.s32.totalorder %v43, 2
    %v52 = vsel %vm50, 1, 0
    %v53 = vsel %vm51, 1, 0
    %v54 = vcvt.s32.f32 %v52
    %v55 = vcvt.s32.f32 %v53
    %vm56 = vcmp.le.s32.totalorder %v42, 126
    %vm57 = vcmp.le.s32.totalorder %v43, 126
    %v58 = vsel %vm56, 1, 0
    %v59 = vsel %vm57, 1, 0
    %v60 = vcvt.s32.f32 %v58
    %v61 = vcvt.s32.f32 %v59
    %vm62 = vcmp.le.s32.totalorder %v42, 125
    %vm63 = vcmp.le.s32.totalorder %v43, 125
    %v64 = vsel %vm62, 1, 0
    %v65 = vsel %vm63, 1, 0
    %v66 = vcvt.s32.f32 %v64
    %v67 = vcvt.s32.f32 %v65
    %vm68 = vcmp.eq.s32.totalorder %v42, 0
    %vm69 = vcmp.eq.s32.totalorder %v43, 0
    %v70 = vsel %vm68, 1, 0
    %v71 = vsel %vm69, 1, 0
    %v72 = vcvt.s32.f32 %v70
    %v73 = vcvt.s32.f32 %v71
    %vm74 = vcmp.eq.s32.totalorder %v42, 127
    %vm75 = vcmp.eq.s32.totalorder %v43, 127
    %v76 = vsel %vm74, 1, 0
    %v77 = vsel %vm75, 1, 0
    %v78 = vcvt.s32.f32 %v76
    %v79 = vcvt.s32.f32 %v77
    %81 = vrot.lane.b32.xlu0 %v16, 2
    %v82 = vpop.permute.xlu0 %81
    %85 = vrot.lane.b32.xlu0 %v15, 2
    %v86 = vpop.permute.xlu0 %85
    %vm87 = vcmask 15360
    %v88 = vsel %vm87, %v86, %v82
    %v91 = vsel %vm87, %v82, %v86
    %v92 = vmul.f32 %v91, %v54
    %v93 = vmul.f32 %v88, %v55
    %94 = vrot.lane.b32.xlu0 %v16, 1
    %v95 = vpop.permute.xlu0 %94
    %97 = vrot.lane.b32.xlu0 %v15, 1
    %v98 = vpop.permute.xlu0 %97
    %vm99 = vcmask 7168
    %v100 = vsel %vm99, %v98, %v95
    %v103 = vsel %vm99, %v95, %v98
    %v104 = vmul.f32 %v103, %v48
    %v105 = vmul.f32 %v100, %v49
    %106 = vrot.lane.b32.xlu0 %v15, 127
    %v107 = vpop.permute.xlu0 %106
    %108 = vrot.lane.b32.xlu0 %v16, 127
    %v109 = vpop.permute.xlu0 %108
    %vm110 = vcmask 1039360
    %v111 = vsel %vm110, %v107, %v109
    %v115 = vsel %vm110, %v109, %v107
    %v116 = vmul.f32 %v111, %v60
    %v117 = vmul.f32 %v115, %v61
    %118 = vrot.lane.b32.xlu0 %v15, 126
    %v119 = vpop.permute.xlu0 %118
    %120 = vrot.lane.b32.xlu0 %v16, 126
    %v121 = vpop.permute.xlu0 %120
    %vm122 = vcmask 1031168
    %v123 = vsel %vm122, %v119, %v121
    %v127 = vsel %vm122, %v121, %v119
    %v128 = vmul.f32 %v123, %v66
    %v129 = vmul.f32 %v127, %v67
    %v130 = vmul.f32 %v15, %v72
    %v131 = vmul.f32 %v16, %v73
    %v132 = vmul.f32 %v15, %v78
    %v133 = vmul.f32 %v16, %v79
    %vm134 = vcmask 1040384
    %v135 = vsel %vm134, 1.0, %v72
    %v136 = vsel %vm134, 1.0, %v73
    %vm137 = vcmask 1041408
    %v138 = vsel %vm137, %v135, %v78
    %v139 = vsel %vm137, %v136, %v79
    %v140 = vld [vmem:[%s1] sm:$0xff]
    %vm141 = vcmask 482304
    %v143 = vsel %vm141, %v140, 0
    %vm145 = vcmask 1042432
    %v147 = vsel %vm145, %v138, 0
    %v150 = vsel %vm145, %v139, 0
    %152 = vmatprep.subr.mxu0 %v93
    %153 = vmatpush1.msra.mxu0 %v92
    %154 = vmatprep.subr.mxu0 %v105
    %155 = vmatpush1.msra.mxu0 %v104
    %156 = vmatprep.subr.mxu0 %v16
    %157 = vmatpush1.msra.mxu0 %v15
    %158 = vmatprep.subr.mxu0 %v117
    %159 = vmatpush1.msra.mxu0 %v116
    %160 = vmatprep.subr.mxu0 %v129
    %161 = vmatpush1.msra.mxu0 %v128
    %162 = vmatprep.subr.mxu0 %v131
    %163 = vmatpush1.msra.mxu0 %v130
    %164 = vmatprep.subr.mxu0 %v133
    %165 = vmatpush1.msra.mxu0 %v132
    %166 = vmatprep.subr.mxu0 %v150
    %167 = vmatpush1.msra.mxu0 %v147
    %168 = vmatprep.subr.mxu0 0.0
    %169 = vmatpush1.msra.mxu0 0.0
    %170 = vmatprep.subr.mxu0 0.0
    %171 = vmatpush1.msra.mxu0 0.0
    %172 = vmatprep.subr.mxu0 0.0
    %173 = vmatpush1.msra.mxu0 0.0
    %174 = vmatprep.subr.mxu0 0.0
    %175 = vmatpush1.msra.mxu0 0.0
    %176 = vmatprep.subr.mxu0 0.0
    %177 = vmatpush1.msra.mxu0 0.0
    %178 = vmatprep.subr.mxu0 0.0
    %179 = vmatpush1.msra.mxu0 0.0
    %180 = vmatprep.subr.mxu0 0.0
    %181 = vmatpush1.msra.mxu0 0.0
    %182 = vmatprep.subr.mxu0 0.0
    %183 = vmatpush1.msra.mxu0 0.0
    %184 = vmatprep.subr.mxu0 0.0
    %185 = vmatpush1.msra.mxu0 0.0
    %186 = vmatprep.subr.mxu0 0.0
    %187 = vmatpush1.msra.mxu0 0.0
    %188 = vmatprep.subr.mxu0 0.0
    %189 = vmatpush1.msra.mxu0 0.0
    %190 = vmatprep.subr.mxu0 0.0
    %191 = vmatpush1.msra.mxu0 0.0
    %192 = vmatprep.subr.mxu0 0.0
    %193 = vmatpush1.msra.mxu0 0.0
    %194 = vmatprep.subr.mxu0 0.0
    %195 = vmatpush1.msra.mxu0 0.0
    %196 = vmatprep.subr.mxu0 0.0
    %197 = vmatpush1.msra.mxu0 0.0
    %198 = vmatprep.subr.mxu0 0.0
    %199 = vmatpush1.msra.mxu0 0.0
    %200 = vmatprep.subr.mxu0 0.0
    %201 = vmatpush1.msra.mxu0 0.0
    %202 = vmatprep.subr.mxu0 0.0
    %203 = vmatpush1.msra.mxu0 0.0
    %204 = vmatprep.subr.mxu0 0.0
    %205 = vmatpush1.msra.mxu0 0.0
    %206 = vmatprep.subr.mxu0 0.0
    %207 = vmatpush1.msra.mxu0 0.0
    %208 = vmatprep.subr.mxu0 0.0
    %209 = vmatpush1.msra.mxu0 0.0
    %210 = vmatprep.subr.mxu0 0.0
    %211 = vmatpush1.msra.mxu0 0.0
    %212 = vmatprep.subr.mxu0 0.0
    %213 = vmatpush1.msra.mxu0 0.0
    %214 = vmatprep.subr.mxu0 0.0
    %215 = vmatpush1.msra.mxu0 0.0
    %216 = vmatprep.mubr.f32.mxu0 0.0
    %217 = vmatmul.mubr.f32.gmra.mrb[0].mxu0 %v143
    %v218 = vpop.f32.mrb[0].mxu0
    %v219 = vadd.f32 0.0, %v218
    %v220 = vpop.f32.mrb[0].mxu0
    %v221 = vadd.f32 0.0, %v220
    %222 = vdwg.mxu0
    %v223 = vsub.f32 0.0, %v219
    %v224 = vsub.f32 0.0, %v221
    %v225 = vmul.f32 %v223, 1.442695
    %v226 = vpow.pop %v225
    %v227 = vmul.f32 %v224, 1.442695
    %v228 = vpow.pop %v227
    %v229 = vadd.f32 %v226, 1.0
    %v230 = vadd.f32 %v228, 1.0
    %v231 = vrcp.pop %v229
    %v232 = vmul.f32 1.0, %v231
    %v233 = vrcp.pop %v230
    %v234 = vmul.f32 1.0, %v233
    %v235 = vmul.f32 %v219, %v232
    %v236 = vmul.f32 %v221, %v234
    %238 = vrot.lane.b32.xlu0 %v236, 1
    %v239 = vpop.permute.xlu0 %238
    %242 = vrot.lane.b32.xlu0 %v235, 1
    %v243 = vpop.permute.xlu0 %242
    %v244 = vsel %vm99, %v243, %v239
    %v247 = vsel %vm99, %v239, %v243
    %v248 = vmul.f32 %v247, %v48
    %v249 = vmul.f32 %v244, %v49
    %250 = vrot.lane.b32.xlu0 %v235, 127
    %v251 = vpop.permute.xlu0 %250
    %252 = vrot.lane.b32.xlu0 %v236, 127
    %v253 = vpop.permute.xlu0 %252
    %v254 = vsel %vm110, %v251, %v253
    %v258 = vsel %vm110, %v253, %v251
    %v259 = vmul.f32 %v254, %v60
    %v260 = vmul.f32 %v258, %v61
    %v261 = vld [vmem:[%s2] sm:$0x1]
    %vm262 = vcmask 203776
    %v264 = vsel %vm262, %v261, 0
    %v267 = vsel %vm134, 1.0, 0
    %269 = vmatprep.subr.mxu0 %v249
    %270 = vmatpush1.msra.mxu0 %v248
    %271 = vmatprep.subr.mxu0 %v236
    %272 = vmatpush1.msra.mxu0 %v235
    %273 = vmatprep.subr.mxu0 %v260
    %274 = vmatpush1.msra.mxu0 %v259
    %275 = vmatprep.subr.mxu0 %v267
    %276 = vmatpush1.msra.mxu0 %v267
    %277 = vmatprep.subr.mxu0 0.0
    %278 = vmatpush1.msra.mxu0 0.0
    %279 = vmatprep.subr.mxu0 0.0
    %280 = vmatpush1.msra.mxu0 0.0
    %281 = vmatprep.subr.mxu0 0.0
    %282 = vmatpush1.msra.mxu0 0.0
    %283 = vmatprep.subr.mxu0 0.0
    %284 = vmatpush1.msra.mxu0 0.0
    %285 = vmatprep.subr.mxu0 0.0
    %286 = vmatpush1.msra.mxu0 0.0
    %287 = vmatprep.subr.mxu0 0.0
    %288 = vmatpush1.msra.mxu0 0.0
    %289 = vmatprep.subr.mxu0 0.0
    %290 = vmatpush1.msra.mxu0 0.0
    %291 = vmatprep.subr.mxu0 0.0
    %292 = vmatpush1.msra.mxu0 0.0
    %293 = vmatprep.subr.mxu0 0.0
    %294 = vmatpush1.msra.mxu0 0.0
    %295 = vmatprep.subr.mxu0 0.0
    %296 = vmatpush1.msra.mxu0 0.0
    %297 = vmatprep.subr.mxu0 0.0
    %298 = vmatpush1.msra.mxu0 0.0
    %299 = vmatprep.subr.mxu0 0.0
    %300 = vmatpush1.msra.mxu0 0.0
    %301 = vmatprep.subr.mxu0 0.0
    %302 = vmatpush1.msra.mxu0 0.0
    %303 = vmatprep.subr.mxu0 0.0
    %304 = vmatpush1.msra.mxu0 0.0
    %305 = vmatprep.subr.mxu0 0.0
    %306 = vmatpush1.msra.mxu0 0.0
    %307 = vmatprep.subr.mxu0 0.0
    %308 = vmatpush1.msra.mxu0 0.0
    %309 = vmatprep.subr.mxu0 0.0
    %310 = vmatpush1.msra.mxu0 0.0
    %311 = vmatprep.subr.mxu0 0.0
    %312 = vmatpush1.msra.mxu0 0.0
    %313 = vmatprep.subr.mxu0 0.0
    %314 = vmatpush1.msra.mxu0 0.0
    %315 = vmatprep.subr.mxu0 0.0
    %316 = vmatpush1.msra.mxu0 0.0
    %317 = vmatprep.subr.mxu0 0.0
    %318 = vmatpush1.msra.mxu0 0.0
    %319 = vmatprep.subr.mxu0 0.0
    %320 = vmatpush1.msra.mxu0 0.0
    %321 = vmatprep.subr.mxu0 0.0
    %322 = vmatpush1.msra.mxu0 0.0
    %323 = vmatprep.subr.mxu0 0.0
    %324 = vmatpush1.msra.mxu0 0.0
    %325 = vmatprep.subr.mxu0 0.0
    %326 = vmatpush1.msra.mxu0 0.0
    %327 = vmatprep.subr.mxu0 0.0
    %328 = vmatpush1.msra.mxu0 0.0
    %329 = vmatprep.subr.mxu0 0.0
    %330 = vmatpush1.msra.mxu0 0.0
    %331 = vmatprep.subr.mxu0 0.0
    %332 = vmatpush1.msra.mxu0 0.0
    %333 = vmatprep.mubr.f32.mxu0 0.0
    %334 = vmatmul.mubr.f32.gmra.mrb[0].mxu0 %v264
    %v335 = vpop.f32.mrb[0].mxu0
    %v336 = vadd.f32 0.0, %v335
    %v337 = vpop.f32.mrb[0].mxu0
    %v338 = vadd.f32 0.0, %v337
    %339 = vdwg.mxu0
    %v340 = vsub.f32 0.0, %v336
    %v341 = vsub.f32 0.0, %v338
    %v342 = vmul.f32 %v340, 1.442695
    %v343 = vpow.pop %v342
    %v344 = vmul.f32 %v341, 1.442695
    %v345 = vpow.pop %v344
    %v346 = vadd.f32 %v343, 1.0
    %v347 = vadd.f32 %v345, 1.0
    %v348 = vrcp.pop %v346
    %v349 = vmul.f32 1.0, %v348
    %v350 = vrcp.pop %v347
    %v351 = vmul.f32 1.0, %v350
    %v352 = vmul.f32 %v336, %v349
    %v353 = vmul.f32 %v338, %v351
    %v356 = vcombine.low %v352, %v353
    %v358 = vunpack.c.l.s4 1966171168
    %v359 = vunpack.c.0.s8 %v358
    %v360 = vlaneseq
    %v361 = vshrl.u32 %v360, 7
    %v362 = vsub.s32 %v359, %v361
    %v363 = vrot.slane %v356, %v362
    %v365 = vunpack.c.l.s4 1966171168
    %v366 = vunpack.c.0.s8 %v365
    %v367 = vlaneseq
    %v368 = vshrl.u32 %v367, 7
    %v369 = vsub.s32 %v366, %v368
    %v370 = vrot.slane %v363, %v369
    %v372 = vlaneseq
    %vm373 = vcmp.ge.s32.totalorder %v372, 0
    %vm374 = vcmp.lt.s32.totalorder %v372, 256
    %vm375 = vmand %vm373, %vm374
    %376 = vst.msk [vmem:[#allocation2] sm:$0x3] %vm375, %v370
    // Predicated region
    $region14: #{apply.1} parent=1 // pred_check
      _
    $region15: #{apply.1} parent=1 // pred_check_branch
      %378 = sbr.rel (0) target = $region17
    $region16: #{apply.1} parent=1 // pred_region
      %s380 = ssub.s32 32, 32
      %381 = vsyncadd [#allocation3], %s380
      %s383 = sshll.u32 [#allocation2], 4
      %s384 = int_to_ptr.vmem [resolvable:$true] %s383
      %386 = dma.vmem_to_hbm [thread:$0]  %s384, 32, %s3, [#allocation3]
    $region17: #{apply.1} parent=1 // pred_fallthru
      _
    // Predicated region
    $region18: #{apply.1} parent=1 // pred_check
      _
    $region19: #{apply.1} parent=1 // pred_check_branch
      %388 = sbr.rel (0) target = $region21
    $region20: #{apply.1} parent=1 // pred_region
      %389 = dma.done [#allocation3], 32
    $region21: #{apply.1} parent=1 // pred_fallthru
      _
    %390 = vsyncpa [#allocation3], 1

</llo_original>
